<compile_context>
chip_gen: v5e
topology: v5e:2x2
jax: 0.10.0
libtpu: 0.0.40
codegen_flags: <defaults>
</compile_context>

<pallas_src>
import jax
import jax.numpy as jnp
from jax.experimental import pallas as pl
from jax.experimental.pallas import tpu as pltpu


def _quad_kernel(x_ref, o_ref):
    x = x_ref[...]
    # Compute in bf16 when the activation is bf16 (native on v6e/v7x);
    # otherwise compute in f32. (On v5e bf16 inputs would still be upcast by
    # the compiler where needed; correctness is unaffected.)
    compute_dtype = jnp.bfloat16 if x.dtype == jnp.bfloat16 else jnp.float32
    xc = x.astype(compute_dtype)
    half = jnp.asarray(0.5, compute_dtype)
    one = jnp.asarray(1.0, compute_dtype)
    # sigmoid(x+1) - sigmoid(x-1) == 0.5 * (tanh((x+1)/2) - tanh((x-1)/2))
    y = half * (jnp.tanh((xc + one) * half) - jnp.tanh((xc - one) * half))
    o_ref[...] = y.astype(o_ref.dtype)


def quad(x, *, target_tile_bytes=2 * 1024 * 1024):
    """Elementwise Quad activation. Accepts any shape; returns same shape/dtype."""
    orig_shape = x.shape
    orig_dtype = x.dtype
    n = x.size
    if n == 0:
        return x

    itemsize = jnp.dtype(orig_dtype).itemsize

    # Pick the widest lane-dense column count that divides n exactly so no
    # padding / post-slice (and therefore no extra HBM pass) is needed.
    cols = 0
    for c in (1024, 512, 256, 128):
        if n % c == 0:
            cols = c
            break

    if cols:
        x2d = x.reshape(n // cols, cols)
        padded = False
    else:
        # Rare ragged case: pad flat length up to a multiple of 128 lanes only
        # (ragged rows are handled by the grid, not by padding).
        cols = 128
        pad = (-n) % cols
        x2d = jnp.concatenate(
            [x.reshape(-1), jnp.zeros((pad,), dtype=orig_dtype)]
        ).reshape(-1, cols)
        padded = True

    rows = x2d.shape[0]

    # ~2 MiB tile per buffer; tile_rows kept a multiple of 8 (sublane tiling).
    tile_rows = max(8, target_tile_bytes // (cols * itemsize))
    tile_rows -= tile_rows % 8
    # If the whole slab is smaller than one tile, use the full row extent
    # (a block equal to the full array dim is always legal).
    block_rows = rows if rows <= tile_rows else tile_rows

    grid = (pl.cdiv(rows, block_rows),)

    out2d = pl.pallas_call(
        _quad_kernel,
        out_shape=jax.ShapeDtypeStruct((rows, cols), orig_dtype),
        grid_spec=pltpu.PrefetchScalarGridSpec(
            num_scalar_prefetch=0,
            grid=grid,
            in_specs=[pl.BlockSpec((block_rows, cols), lambda i: (i, 0))],
            out_specs=pl.BlockSpec((block_rows, cols), lambda i: (i, 0)),
        ),
        compiler_params=pltpu.CompilerParams(
            dimension_semantics=("parallel",),
        ),
        cost_estimate=pl.CostEstimate(
            flops=6 * n,
            transcendentals=2 * n,
            bytes_accessed=2 * n * itemsize,
        ),
    )(x2d)

    if padded:
        return out2d.reshape(-1)[:n].reshape(orig_shape)
    return out2d.reshape(orig_shape)


def quad_ref(x):
    xf = x.astype(jnp.float32)
    return (jax.nn.sigmoid(xf + 1.0) - jax.nn.sigmoid(xf - 1.0)).astype(x.dtype)


if __name__ == "__main__":
    key = jax.random.PRNGKey(0)
    # NCHW input, as the PyTorch module would typically receive.
    x = jax.random.normal(key, (2, 4, 16, 16), dtype=jnp.float32)

    out = quad(x)
    out = jax.block_until_ready(out)

    ref = quad_ref(x)
    assert out.shape == x.shape and out.dtype == x.dtype
    # tanh-identity form differs from two-sigmoid reference only by a few ULP.
    assert jnp.allclose(out, ref, atol=1e-5, rtol=1e-5)

    print("KERNEL_OK")
</pallas_src>

<mosaic_0001>
module attributes {stable_mosaic.version = 11 : i64} {
  func.func @_quad_kernel(%arg0: i32, %arg1: memref<2x1024xf32, #tpu.memory_space<vmem>>, %arg2: memref<2x1024xf32, #tpu.memory_space<vmem>>) attributes {dimension_semantics = [#tpu.dimension_semantics<parallel>], iteration_bounds = array<i64: 1>, scalar_prefetch = 0 : i64, scratch_operands = 0 : i64, tpu.core_type = #tpu.core_type<tc>, window_params = [{transform_indices = @transform_0, window_bounds = array<i64: 2, 1024>}, {transform_indices = @transform_1, window_bounds = array<i64: 2, 1024>}]} {
    %c0 = arith.constant 0 : index
    %c0_0 = arith.constant 0 : index
    %0 = vector.load %arg1[%c0, %c0_0] : memref<2x1024xf32, #tpu.memory_space<vmem>>, vector<2x1024xf32>
    %cst = arith.constant 1.000000e+00 : f32
    %1 = vector.broadcast %cst : f32 to vector<2x1024xf32>
    %2 = arith.addf %0, %1 : vector<2x1024xf32>
    %cst_1 = arith.constant 5.000000e-01 : f32
    %3 = vector.broadcast %cst_1 : f32 to vector<2x1024xf32>
    %4 = arith.mulf %2, %3 : vector<2x1024xf32>
    %5 = math.tanh %4 : vector<2x1024xf32>
    %cst_2 = arith.constant 1.000000e+00 : f32
    %6 = vector.broadcast %cst_2 : f32 to vector<2x1024xf32>
    %7 = arith.subf %0, %6 : vector<2x1024xf32>
    %cst_3 = arith.constant 5.000000e-01 : f32
    %8 = vector.broadcast %cst_3 : f32 to vector<2x1024xf32>
    %9 = arith.mulf %7, %8 : vector<2x1024xf32>
    %10 = math.tanh %9 : vector<2x1024xf32>
    %11 = arith.subf %5, %10 : vector<2x1024xf32>
    %cst_4 = arith.constant 5.000000e-01 : f32
    %12 = vector.broadcast %cst_4 : f32 to vector<2x1024xf32>
    %13 = arith.mulf %12, %11 : vector<2x1024xf32>
    %c0_5 = arith.constant 0 : index
    %c0_6 = arith.constant 0 : index
    %14 = vector.load %arg2[%c0_5, %c0_6] : memref<2x1024xf32, #tpu.memory_space<vmem>>, vector<2x1024xf32>
    tpu.vector_store %arg2[%c0_5, %c0_6], %13 {strides = array<i32>} : memref<2x1024xf32, #tpu.memory_space<vmem>>, vector<2x1024xf32>,
    return
  }
  func.func @transform_0(%arg0: i32) -> (i32, i32) {
    %c0_i32 = arith.constant 0 : i32
    %c0_i32_0 = arith.constant 0 : i32
    return %arg0, %c0_i32 : i32, i32
  }
  func.func @transform_1(%arg0: i32) -> (i32, i32) {
    %c0_i32 = arith.constant 0 : i32
    %c0_i32_0 = arith.constant 0 : i32
    return %arg0, %c0_i32 : i32, i32
  }
}

</mosaic_0001>

<llo_original>
// kernel: tpu_custom_call.1
$region0: #{tpu_custom_call.1}
  #allocation0 [shape = 'u32[]', space=smem, size = 0x4, offset = 0x4, fixed_abs, tag = 'smem constant byte address 0x4 - core index']
  #allocation1 [shape = 'u32[72,128]{1,0:T(1,128)}', space=vmem, size = 0x9000, scoped, tag = 'internal scratch']
  %s0 = inlined_call_operand.hbm [shape: f32[2,1024], index: 0, kind: input, shape index: {}]
  %s1 = inlined_call_operand.hbm [shape: f32[2,1024], index: 1, kind: output, shape index: {}]
  %s2 = sld [smem:[#allocation0]]
  $region18: #{tpu_custom_call.1} parent=0
    _
  %s4 = ssub.s32 1, %s2
  %s5 = scalar_select 0, %s4, %s2
  $region1: #{tpu_custom_call.1} parent=0
    #allocation2 [shape = 'u8[8192]{0}', space=vmem, size = 0x2000, scoped, tag = 'input window, operand 0, single buffered']
    #allocation3 [shape = 's32[1]{0}', space=sflag, size = 0x4, scoped, tag = 'scoped memory for tpu_custom_call.1']
    #allocation4 [shape = 's32[1]{0}', space=sflag, size = 0x4, scoped, tag = 'scoped memory for tpu_custom_call.1']
    #allocation5 [shape = 'u8[8192]{0}', space=vmem, size = 0x2000, scoped, tag = 'output window, operand 0, single buffered']
    %6 = vsyncpa [#allocation3], 0
    %7 = vsyncpa [#allocation4], 0
    // Predicated region
    $region2: #{tpu_custom_call.1} parent=1 // pred_check
      _
    $region3: #{tpu_custom_call.1} parent=1 // pred_check_branch
      %9 = sbr.rel (0) target = $region5
    $region4: #{tpu_custom_call.1} parent=1 // pred_region
      %11 = vsyncadd [#allocation3], 0
      %s13 = sshll.u32 %s0, 4
      %s14 = int_to_ptr.hbm [resolvable:$true] %s13
      %s15 = sshll.u32 [#allocation2], 4
      %s16 = int_to_ptr.vmem [resolvable:$true] %s15
      %18 = dma.hbm_to_vmem [thread:$0]  %s14, 256, %s16, [#allocation3]
    $region5: #{tpu_custom_call.1} parent=1 // pred_fallthru
      _
    // Predicated region
    $region6: #{tpu_custom_call.1} parent=1 // pred_check
      _
    $region7: #{tpu_custom_call.1} parent=1 // pred_check_branch
      %20 = sbr.rel (0) target = $region9
    $region8: #{tpu_custom_call.1} parent=1 // pred_region
      %22 = dma.done [#allocation3], 256
    $region9: #{tpu_custom_call.1} parent=1 // pred_fallthru
      _
    %v23 = vld [vmem:[#allocation2] sm:$0xff]
    %v24 = vld [vmem:[#allocation2 + $0x8] sm:$0xff]
    %v25 = vadd.f32 %v23, 1.0
    %v26 = vadd.f32 %v24, 1.0
    %v27 = vmul.f32 %v25, 0.5
    %v28 = vmul.f32 %v26, 0.5
    %v29 = vtanh.pop %v27
    %v30 = vtanh.pop %v28
    %v31 = vsub.f32 %v23, 1.0
    %v32 = vsub.f32 %v24, 1.0
    %v33 = vmul.f32 %v31, 0.5
    %v34 = vmul.f32 %v32, 0.5
    %v35 = vtanh.pop %v33
    %v36 = vtanh.pop %v34
    %v37 = vsub.f32 %v29, %v35
    %v38 = vsub.f32 %v30, %v36
    %v39 = vmul.f32 %v37, 0.5
    %v40 = vmul.f32 %v38, 0.5
    %41 = vst [vmem:[#allocation5] sm:$0xff] %v39
    %42 = vst [vmem:[#allocation5 + $0x8] sm:$0xff] %v40
    // Predicated region
    $region10: #{tpu_custom_call.1} parent=1 // pred_check
      _
    $region11: #{tpu_custom_call.1} parent=1 // pred_check_branch
      %44 = sbr.rel (0) target = $region13
    $region12: #{tpu_custom_call.1} parent=1 // pred_region
      %46 = vsyncadd [#allocation4], 0
      %s48 = sshll.u32 [#allocation5], 4
      %s49 = int_to_ptr.vmem [resolvable:$true] %s48
      %s50 = sshll.u32 %s1, 4
      %s51 = int_to_ptr.hbm [resolvable:$true] %s50
      %53 = dma.vmem_to_hbm [thread:$0]  %s49, 256, %s51, [#allocation4]
    $region13: #{tpu_custom_call.1} parent=1 // pred_fallthru
      _
    // Predicated region
    $region14: #{tpu_custom_call.1} parent=1 // pred_check
      _
    $region15: #{tpu_custom_call.1} parent=1 // pred_check_branch
      %55 = sbr.rel (0) target = $region17
    $region16: #{tpu_custom_call.1} parent=1 // pred_region
      %57 = dma.done [#allocation4], 256
    $region17: #{tpu_custom_call.1} parent=1 // pred_fallthru
      _
    %58 = vsyncpa [#allocation3], 1
    %59 = vsyncpa [#allocation4], 1

</llo_original>
